<compile_context>
chip_gen: v7x
topology: tpu7x:2x2x1
jax: 0.10.0
libtpu: 0.0.40
codegen_flags: <defaults>
</compile_context>

<pallas_src>
import jax
import jax.numpy as jnp
from jax.experimental import pallas as pl
from jax.experimental.pallas import tpu as pltpu


def _gaussian_smearing_kernel(coeff_ref, dist_ref, offset_ref, out_ref):
    # coeff_ref : (1,)    f32 in SMEM
    # dist_ref  : (tm, 1) f32 in VMEM
    # offset_ref: (1, G)  f32 in VMEM (grid-invariant block)
    # out_ref   : (tm, G) f32 in VMEM
    coeff = coeff_ref[0]                       # one sreg load
    diff = dist_ref[...] - offset_ref[...]     # broadcast -> (tm, G) on VPU
    out_ref[...] = jnp.exp(coeff * (diff * diff))  # exp on EUP


def _choose_tile(n, tm_max=4096, min_steps=4):
    """Pick a large, sublane-aligned row tile but keep >= min_steps grid steps."""
    tm = max(8, -(-n // min_steps))   # ceil(n / min_steps)
    tm = ((tm + 7) // 8) * 8          # sublane-align (multiple of 8)
    return min(tm_max, tm)


def gaussian_smearing(dist, offset, coeff, *, tm=None):
    """dist: any shape; returns (dist.size, num_gaussians) float32."""
    dist_flat = jnp.reshape(dist, (-1, 1)).astype(jnp.float32)
    n = dist_flat.shape[0]
    g = offset.shape[0]
    offset_row = jnp.reshape(offset, (1, g)).astype(jnp.float32)
    coeff_arr = jnp.full((1,), coeff, dtype=jnp.float32)

    if tm is None:
        tm = _choose_tile(n)

    grid = (pl.cdiv(n, tm),)  # ragged final block is clamped/write-masked

    return pl.pallas_call(
        _gaussian_smearing_kernel,
        out_shape=jax.ShapeDtypeStruct((n, g), jnp.float32),
        grid_spec=pltpu.PrefetchScalarGridSpec(
            num_scalar_prefetch=0,
            grid=grid,
            in_specs=[
                # coeff: tiny scalar, lives in SMEM, no recompile per value.
                pl.BlockSpec(memory_space=pltpu.MemorySpace.SMEM),
                # dist column, tiled along rows.
                pl.BlockSpec((tm, 1), lambda i: (i, 0)),
                # offsets: grid-invariant 200 B row, stays resident in VMEM.
                pl.BlockSpec((1, g), lambda i: (0, 0)),
            ],
            out_specs=pl.BlockSpec((tm, g), lambda i: (i, 0)),
        ),
        compiler_params=pltpu.CompilerParams(
            dimension_semantics=("parallel",),
        ),
    )(coeff_arr, dist_flat, offset_row)


def make_gaussian_smearing_params(start=0.0, stop=5.0, num_gaussians=50):
    offset = jnp.linspace(start, stop, num_gaussians, dtype=jnp.float32)
    step = (stop - start) / (num_gaussians - 1)
    coeff = -0.5 / step ** 2
    return offset, coeff


if __name__ == "__main__":
    key = jax.random.PRNGKey(0)
    # Small example: 200 pairwise distances in [0, 5).
    dist = jax.random.uniform(key, (200,), dtype=jnp.float32,
                              minval=0.0, maxval=5.0)

    offset, coeff = make_gaussian_smearing_params(start=0.0, stop=5.0,
                                                  num_gaussians=50)

    # Reference in plain JAX.
    ref = jnp.exp(coeff * (dist[:, None] - offset[None, :]) ** 2)

    # Default tiling path (ragged final block: 4 grid steps of 56 rows).
    out = gaussian_smearing(dist, offset, coeff)
    out = jax.block_until_ready(out)
    assert out.shape == (200, 50), out.shape
    assert jnp.allclose(out, ref, atol=1e-6, rtol=1e-6)

    # Large-tile path (single grid step, block bigger than the array).
    out_big = gaussian_smearing(dist, offset, coeff, tm=4096)
    out_big = jax.block_until_ready(out_big)
    assert jnp.allclose(out_big, ref, atol=1e-6, rtol=1e-6)

    print("KERNEL_OK")
</pallas_src>

<mosaic_0001>
module attributes {stable_mosaic.version = 11 : i64} {
  func.func @_gaussian_smearing_kernel(%arg0: i32, %arg1: memref<1xf32, #tpu.memory_space<smem>>, %arg2: memref<56x1xf32, #tpu.memory_space<vmem>>, %arg3: memref<1x50xf32, #tpu.memory_space<vmem>>, %arg4: memref<56x50xf32, #tpu.memory_space<vmem>>) attributes {dimension_semantics = [#tpu.dimension_semantics<parallel>], iteration_bounds = array<i64: 4>, scalar_prefetch = 0 : i64, scratch_operands = 0 : i64, tpu.core_type = #tpu.core_type<tc>, window_params = [{transform_indices = @transform_0, window_bounds = array<i64: 1>}, {transform_indices = @transform_1, window_bounds = array<i64: 56, 1>}, {pipeline_mode = #tpu.pipeline_mode<synchronous>, transform_indices = @transform_2, window_bounds = array<i64: 1, 50>}, {transform_indices = @transform_3, window_bounds = array<i64: 56, 50>}]} {
    %c0 = arith.constant 0 : index
    %0 = memref.load %arg1[%c0] : memref<1xf32, #tpu.memory_space<smem>>
    %c0_0 = arith.constant 0 : index
    %c0_1 = arith.constant 0 : index
    %1 = vector.load %arg2[%c0_0, %c0_1] : memref<56x1xf32, #tpu.memory_space<vmem>>, vector<56x1xf32>
    %c0_2 = arith.constant 0 : index
    %c0_3 = arith.constant 0 : index
    %2 = vector.load %arg3[%c0_2, %c0_3] : memref<1x50xf32, #tpu.memory_space<vmem>>, vector<1x50xf32>
    %3 = vector.broadcast %1 : vector<56x1xf32> to vector<56x50xf32>
    %4 = vector.broadcast %2 : vector<1x50xf32> to vector<56x50xf32>
    %5 = arith.subf %3, %4 : vector<56x50xf32>
    %6 = arith.mulf %5, %5 : vector<56x50xf32>
    %7 = vector.broadcast %0 : f32 to vector<56x50xf32>
    %8 = arith.mulf %7, %6 : vector<56x50xf32>
    %9 = math.exp %8 : vector<56x50xf32>
    %c0_4 = arith.constant 0 : index
    %c0_5 = arith.constant 0 : index
    %10 = vector.load %arg4[%c0_4, %c0_5] : memref<56x50xf32, #tpu.memory_space<vmem>>, vector<56x50xf32>
    tpu.vector_store %arg4[%c0_4, %c0_5], %9 {strides = array<i32>} : memref<56x50xf32, #tpu.memory_space<vmem>>, vector<56x50xf32>,
    return
  }
  func.func @transform_0(%arg0: i32) -> i32 {
    %c0_i32 = arith.constant 0 : i32
    %c0_i32_0 = arith.constant 0 : i32
    return %c0_i32 : i32
  }
  func.func @transform_1(%arg0: i32) -> (i32, i32) {
    %c0_i32 = arith.constant 0 : i32
    %c0_i32_0 = arith.constant 0 : i32
    return %arg0, %c0_i32 : i32, i32
  }
  func.func @transform_2(%arg0: i32) -> (i32, i32) {
    %c0_i32 = arith.constant 0 : i32
    %c0_i32_0 = arith.constant 0 : i32
    %c0_i32_1 = arith.constant 0 : i32
    return %c0_i32, %c0_i32_0 : i32, i32
  }
  func.func @transform_3(%arg0: i32) -> (i32, i32) {
    %c0_i32 = arith.constant 0 : i32
    %c0_i32_0 = arith.constant 0 : i32
    return %arg0, %c0_i32 : i32, i32
  }
}

</mosaic_0001>

<llo_original>
// kernel: tpu_custom_call.1
$region0: #{tpu_custom_call.1}
  #allocation0 [shape = 'u32[]', space=smem, size = 0x4, offset = 0x4, fixed_abs, tag = 'smem constant byte address 0x4 - core index']
  #allocation1 [shape = 'u32[144,128]{1,0:T(1,128)}', space=vmem, size = 0x12000, scoped, tag = 'internal scratch']
  #allocation2 [shape = 'f32[1]{0:T(128)S(6)}', space=smem, size = 0x200, scoped, tag = 'scoped memory for tpu_custom_call.1']
  %s0 = inlined_call_operand.<no memory space> [shape: f32[1], index: 0, kind: input, shape index: {}]
  %s1 = inlined_call_operand.vmem [shape: f32[200,1], index: 1, kind: input, shape index: {}]
  %s2 = inlined_call_operand.vmem [shape: f32[1,50], index: 2, kind: input, shape index: {}]
  %s3 = inlined_call_operand.vmem [shape: f32[200,50], index: 3, kind: output, shape index: {}]
  %s4 = sld [smem:[#allocation0]]
  $region93: #{tpu_custom_call.1} parent=0
    _
  %s6 = ssub.s32 1, %s4
  %s7 = scalar_select 0, %s6, %s4
  %8 = sst [smem:[#allocation2]] %s0
  $region1: #{tpu_custom_call.1} parent=0
    #allocation3 [shape = 'u8[57344]{0}', space=vmem, size = 0xe000, scoped, tag = 'output window, operand 0']
    loop: start=0, step=1, limit=6
    $region2: #{tpu_custom_call.1} parent=1 // loop_pre_header
      _
    $region3: #{tpu_custom_call.1} parent=1 // loop_header
      %s10 = sphi 0, %s14
      %p11 = scmp.ge.s32.totalorder %s10, 6
      %s18 = sphi 0, %s18
      %s20 = sphi 0, %s18
      %s21 = sphi 0, %s20
      %s35 = sphi 0, %s21
      %s41 = sphi 0, %s43
      %s44 = sphi 0, %s41
      %s45 = sphi 0, %s44
      %s61 = sphi 0, %s45
      %s65 = sphi 0, %s65
      %s67 = sphi 0, %s65
      %s68 = sphi 0, %s67
      %s82 = sphi 0, %s68
      %s88 = sphi 0, %s90
      %s91 = sphi 0, %s88
      %s92 = sphi 0, %s91
      %s108 = sphi 0, %s92
    $region4: #{tpu_custom_call.1} parent=1 // loop_header_branch
      %13 = sbr.rel (%p11) target = $region8
    $region5: #{tpu_custom_call.1} parent=1 // loop_body
      %s15 = ssub.s32 %s10, 1
      %s16 = ssub.s32 %s10, 2
      %s17 = sadd.s32 %s10, 1
      %s19 = sadd.s32 %s18, 1
      %p22 = scmp.eq.s32.totalorder %s10, 3
      %p23 = scmp.ne.s32.totalorder %s18, %s20
      %p24 = scmp.eq.s32.totalorder %s10, 0
      %p25 = por %p23, %p24
      %p26 = scmp.ne.s32.totalorder %s18, %s20
      %p27 = scmp.eq.s32.totalorder %s15, 3
      %p28 = por %p26, %p27
      %p29 = scmp.ne.s32.totalorder %s20, %s21
      %p30 = scmp.eq.s32.totalorder %s15, 0
      %p31 = por %p29, %p30
      %p32 = scmp.ne.s32.totalorder %s20, %s21
      %p33 = scmp.eq.s32.totalorder %s16, 3
      %p34 = por %p32, %p33
      %p36 = scmp.ne.s32.totalorder %s21, %s35
      %p37 = scmp.eq.s32.totalorder %s16, 0
      %p38 = por %p36, %p37
      %s39 = ssub.s32 %s10, %s17
      %p40 = scmp.eq.s32.totalorder %s39, 0
      %s42 = sadd.s32 %s41, 1
      %s43 = scalar_select %p40, %s41, %s42
      %p46 = pneg %p40
      %p47 = scmp.eq.s32.totalorder %s10, 3
      %p48 = por %p46, %p47
      %p49 = scmp.ne.s32.totalorder %s41, %s44
      %p50 = scmp.eq.s32.totalorder %s10, 0
      %p51 = por %p49, %p50
      %p52 = scmp.ne.s32.totalorder %s41, %s44
      %p53 = scmp.eq.s32.totalorder %s15, 3
      %p54 = por %p52, %p53
      %p55 = scmp.ne.s32.totalorder %s44, %s45
      %p56 = scmp.eq.s32.totalorder %s15, 0
      %p57 = por %p55, %p56
      %p58 = scmp.ne.s32.totalorder %s44, %s45
      %p59 = scmp.eq.s32.totalorder %s16, 3
      %p60 = por %p58, %p59
      %p62 = scmp.ne.s32.totalorder %s45, %s61
      %p63 = scmp.eq.s32.totalorder %s16, 0
      %p64 = por %p62, %p63
      %s66 = sadd.s32 %s65, 1
      %p69 = scmp.eq.s32.totalorder %s10, 3
      %p70 = scmp.ne.s32.totalorder %s65, %s67
      %p71 = scmp.eq.s32.totalorder %s10, 0
      %p72 = por %p70, %p71
      %p73 = scmp.ne.s32.totalorder %s65, %s67
      %p74 = scmp.eq.s32.totalorder %s15, 3
      %p75 = por %p73, %p74
      %p76 = scmp.ne.s32.totalorder %s67, %s68
      %p77 = scmp.eq.s32.totalorder %s15, 0
      %p78 = por %p76, %p77
      %p79 = scmp.ne.s32.totalorder %s67, %s68
      %p80 = scmp.eq.s32.totalorder %s16, 3
      %p81 = por %p79, %p80
      %p83 = scmp.ne.s32.totalorder %s68, %s82
      %p84 = scmp.eq.s32.totalorder %s16, 0
      %p85 = por %p83, %p84
      %s86 = ssub.s32 %s10, %s17
      %p87 = scmp.eq.s32.totalorder %s86, 0
      %s89 = sadd.s32 %s88, 1
      %s90 = scalar_select %p87, %s88, %s89
      %p93 = pneg %p87
      %p94 = scmp.eq.s32.totalorder %s10, 3
      %p95 = por %p93, %p94
      %p96 = scmp.ne.s32.totalorder %s88, %s91
      %p97 = scmp.eq.s32.totalorder %s10, 0
      %p98 = por %p96, %p97
      %p99 = scmp.ne.s32.totalorder %s88, %s91
      %p100 = scmp.eq.s32.totalorder %s15, 3
      %p101 = por %p99, %p100
      %p102 = scmp.ne.s32.totalorder %s91, %s92
      %p103 = scmp.eq.s32.totalorder %s15, 0
      %p104 = por %p102, %p103
      %p105 = scmp.ne.s32.totalorder %s91, %s92
      %p106 = scmp.eq.s32.totalorder %s16, 3
      %p107 = por %p105, %p106
      %p109 = scmp.ne.s32.totalorder %s92, %s108
      %p110 = scmp.eq.s32.totalorder %s16, 0
      %p111 = por %p109, %p110
      %p112 = scmp.le.s32.totalorder 1, %s10
      %p113 = scmp.lt.s32.totalorder %s10, 5
      %p114 = pnand %p112, %p113
      %p115 = pneg %p114
      // Predicated region
      $region9: #{tpu_custom_call.1} parent=5 // pred_check
        _
      $region10: #{tpu_custom_call.1} parent=5 // pred_check_branch
        %117 = sbr.rel (%p114) target = $region12
      $region11: #{tpu_custom_call.1} parent=5 // pred_region
        %s118 = ssub.s32 %s10, 1
        // Predicated region
        $region13: #{tpu_custom_call.1} parent=11 // pred_check
          %p119 = pneg %p31
        $region14: #{tpu_custom_call.1} parent=11 // pred_check_branch
          %121 = sbr.rel (%p119) target = $region16
        $region15: #{tpu_custom_call.1} parent=11 // pred_region
          _
        $region16: #{tpu_custom_call.1} parent=11 // pred_fallthru
          _
        // Predicated region
        $region17: #{tpu_custom_call.1} parent=11 // pred_check
          %p122 = pneg %p78
        $region18: #{tpu_custom_call.1} parent=11 // pred_check_branch
          %124 = sbr.rel (%p122) target = $region20
        $region19: #{tpu_custom_call.1} parent=11 // pred_region
          _
        $region20: #{tpu_custom_call.1} parent=11 // pred_fallthru
          _
      $region12: #{tpu_custom_call.1} parent=5 // pred_fallthru
        _
      %p125 = scmp.lt.s32.totalorder %s10, 4
      // Predicated region
      $region21: #{tpu_custom_call.1} parent=5 // pred_check
        %p126 = pneg %p125
      $region22: #{tpu_custom_call.1} parent=5 // pred_check_branch
        %128 = sbr.rel (%p126) target = $region24
      $region23: #{tpu_custom_call.1} parent=5 // pred_region
        // Predicated region
        $region25: #{tpu_custom_call.1} parent=23 // pred_check
          %p129 = pneg %p51
        $region26: #{tpu_custom_call.1} parent=23 // pred_check_branch
          %131 = sbr.rel (%p129) target = $region28
        $region27: #{tpu_custom_call.1} parent=23 // pred_region
          %s132 = smul.u32 7, %s10
          %s133 = ssub.s32 25, %s132
          %p134 = scmp.lt.s32.totalorder %s133, 7
          %s135 = scalar_select %p134, %s133, 7
          %s136 = smul.u32 128, %s135
          %p137 = scmp.lt.s32.totalorder %s132, 24
          %s138 = scalar_select %p137, %s132, 24
          %s139 = smul.addr %s138, 8
          %s140 = scalar_lea.vmem %s1, %s139
          %s141 = smul.u32 7, %s10
          %s142 = ssub.s32 25, %s141
          %p143 = scmp.lt.s32.totalorder %s142, 7
          %s144 = scalar_select %p143, %s142, 7
          %s145 = smul.u32 128, %s144
        $region28: #{tpu_custom_call.1} parent=23 // pred_fallthru
          _
      $region24: #{tpu_custom_call.1} parent=5 // pred_fallthru
        _
      %p146 = scmp.le.s32.totalorder 1, %s10
      %p147 = scmp.lt.s32.totalorder %s10, 5
      %p148 = pnand %p146, %p147
      %p149 = pneg %p148
      // Predicated region
      $region29: #{tpu_custom_call.1} parent=5 // pred_check
        _
      $region30: #{tpu_custom_call.1} parent=5 // pred_check_branch
        %151 = sbr.rel (%p148) target = $region32
      $region31: #{tpu_custom_call.1} parent=5 // pred_region
        %s152 = ssub.s32 %s10, 1
        %p153 = pneg %p31
        %p154 = pneg %p28
        %s155 = smul.u32 7, %s15
        %s156 = ssub.s32 25, %s155
        %p157 = scmp.lt.s32.totalorder %s156, 7
        %s158 = scalar_select %p157, %s156, 7
        %s159 = smul.u32 128, %s158
        %p160 = scmp.lt.s32.totalorder %s155, 24
        %s161 = scalar_select %p160, %s155, 24
        %s162 = smul.addr %s161, 8
        %s163 = scalar_lea.vmem %s1, %s162
        %p164 = pneg %p57
        %p165 = pneg %p54
        %p166 = pneg %p78
        %p167 = pneg %p75
        %p168 = pneg %p104
        %p169 = pneg %p101
        %s170 = sand.u32 %s91, 1
        %s171 = sand.u32 %s91, 1
        %s172 = smul.addr %s171, 56
        %s173 = scalar_lea.vmem [#allocation3], %s172
        %s174 = smul.u32 7, %s15
        %s175 = ssub.s32 25, %s174
        %p176 = scmp.lt.s32.totalorder %s175, 7
        %s177 = scalar_select %p176, %s175, 7
        %s178 = smul.u32 128, %s177
        %p179 = scmp.lt.s32.totalorder %s174, 24
        %s180 = scalar_select %p179, %s174, 24
        %s181 = smul.addr %s180, 8
        %s182 = scalar_lea.vmem %s1, %s181
        %s183 = smul.u32 7, %s15
        %s184 = ssub.s32 25, %s183
        %p185 = scmp.lt.s32.totalorder %s184, 7
        %s186 = scalar_select %p185, %s184, 7
        %s187 = smul.u32 128, %s186
        %s188 = smul.u32 7, %s15
        %s189 = ssub.s32 25, %s188
        %p190 = scmp.lt.s32.totalorder %s189, 7
        %s191 = scalar_select %p190, %s189, 7
        %s192 = smul.u32 128, %s191
        %s193 = sld [smem:[#allocation2]]
        %v194 = vld [vmem:[%s182] sm:$0xff]
        %v195 = vld [vmem:[%s182 + $0x8] sm:$0xff]
        %v196 = vld [vmem:[%s182 + $0x10] sm:$0xff]
        %v197 = vld [vmem:[%s182 + $0x18] sm:$0xff]
        %v198 = vld [vmem:[%s182 + $0x20] sm:$0xff]
        %v199 = vld [vmem:[%s182 + $0x28] sm:$0xff]
        %v200 = vld [vmem:[%s182 + $0x30] sm:$0xff]
        %v201 = vld [vmem:[%s2] sm:$0x1]
        %203 = vset.pattern.permute.xlu0 0
        %204 = vperm.xlu0 %203, %v194
        %v205 = vpop.permute.xlu0 %204
        %208 = vset.pattern.permute.xlu0 0
        %209 = vperm.xlu0 %208, %v195
        %v210 = vpop.permute.xlu0 %209
        %213 = vset.pattern.permute.xlu0 0
        %214 = vperm.xlu0 %213, %v196
        %v215 = vpop.permute.xlu0 %214
        %218 = vset.pattern.permute.xlu0 0
        %219 = vperm.xlu0 %218, %v197
        %v220 = vpop.permute.xlu0 %219
        %223 = vset.pattern.permute.xlu0 0
        %224 = vperm.xlu0 %223, %v198
        %v225 = vpop.permute.xlu0 %224
        %228 = vset.pattern.permute.xlu0 0
        %229 = vperm.xlu0 %228, %v199
        %v230 = vpop.permute.xlu0 %229
        %233 = vset.pattern.permute.xlu0 0
        %234 = vperm.xlu0 %233, %v200
        %v235 = vpop.permute.xlu0 %234
        %v238 = vlaneseq
        %v239 = vshrl.u32 %v238, 7
        %v240 = vsub.s32 0, %v239
        %v241 = vrot.slane %v201, %v240
        %v243 = vsub.f32 %v205, %v241
        %v244 = vsub.f32 %v210, %v241
        %v245 = vsub.f32 %v215, %v241
        %v246 = vsub.f32 %v220, %v241
        %v247 = vsub.f32 %v225, %v241
        %v248 = vsub.f32 %v230, %v241
        %v249 = vsub.f32 %v235, %v241
        %v250 = vmul.f32 %v243, %v243
        %v251 = vmul.f32 %v244, %v244
        %v252 = vmul.f32 %v245, %v245
        %v253 = vmul.f32 %v246, %v246
        %v254 = vmul.f32 %v247, %v247
        %v255 = vmul.f32 %v248, %v248
        %v256 = vmul.f32 %v249, %v249
        %v257 = vstv %s193
        %v258 = vmul.f32 %v257, %v250
        %v259 = vmul.f32 %v257, %v251
        %v260 = vmul.f32 %v257, %v252
        %v261 = vmul.f32 %v257, %v253
        %v262 = vmul.f32 %v257, %v254
        %v263 = vmul.f32 %v257, %v255
        %v264 = vmul.f32 %v257, %v256
        %v265 = vmul.f32 %v258, 1.442695
        %v266 = vpow.pop %v265
        %v267 = vmul.f32 %v259, 1.442695
        %v268 = vpow.pop %v267
        %v269 = vmul.f32 %v260, 1.442695
        %v270 = vpow.pop %v269
        %v271 = vmul.f32 %v261, 1.442695
        %v272 = vpow.pop %v271
        %v273 = vmul.f32 %v262, 1.442695
        %v274 = vpow.pop %v273
        %v275 = vmul.f32 %v263, 1.442695
        %v276 = vpow.pop %v275
        %v277 = vmul.f32 %v264, 1.442695
        %v278 = vpow.pop %v277
        %vm279 = vcmask 408576
        %280 = vst.msk [vmem:[%s173] sm:$0xff] %vm279, %v266
        %281 = vst.msk [vmem:[%s173 + $0x8] sm:$0xff] %vm279, %v268
        %282 = vst.msk [vmem:[%s173 + $0x10] sm:$0xff] %vm279, %v270
        %283 = vst.msk [vmem:[%s173 + $0x18] sm:$0xff] %vm279, %v272
        %284 = vst.msk [vmem:[%s173 + $0x20] sm:$0xff] %vm279, %v274
        %285 = vst.msk [vmem:[%s173 + $0x28] sm:$0xff] %vm279, %v276
        %286 = vst.msk [vmem:[%s173 + $0x30] sm:$0xff] %vm279, %v278
        %s287 = sand.u32 %s91, 1
        %s288 = sand.u32 %s91, 1
        %s289 = smul.addr %s288, 56
        %s290 = scalar_lea.vmem [#allocation3], %s289
        // Predicated region
        $region33: #{tpu_custom_call.1} parent=31 // pred_check
          %p291 = pneg %p101
        $region34: #{tpu_custom_call.1} parent=31 // pred_check_branch
          %293 = sbr.rel (%p291) target = $region36
        $region35: #{tpu_custom_call.1} parent=31 // pred_region
          %s294 = smul.u32 7, %s15
          %s295 = ssub.s32 25, %s294
          %p296 = scmp.lt.s32.totalorder %s295, 7
          %s297 = scalar_select %p296, %s295, 7
          %s298 = smul.u32 128, %s297
          %p299 = scmp.ne.s32.totalorder 0, %s298
          %s300 = smul.addr %s294, 8
          %s301 = scalar_lea.vmem %s3, %s300
          // Predicated region
          $region37: #{tpu_custom_call.1} parent=35 // pred_check
            %p302 = pneg %p299
          $region38: #{tpu_custom_call.1} parent=35 // pred_check_branch
            %304 = sbr.rel (%p302) target = $region40
          $region39: #{tpu_custom_call.1} parent=35 // pred_region
            // Predicated region
            $region41: #{tpu_custom_call.1} parent=39 // pred_check
              _
            $region42: #{tpu_custom_call.1} parent=39 // pred_check_branch
              %306 = sbr.rel (0) target = $region44
            $region43: #{tpu_custom_call.1} parent=39 // pred_region
              // Predicated region
              $region63: #{tpu_custom_call.1} parent=43 // pred_check
                _
              $region64: #{tpu_custom_call.1} parent=43 // pred_check_branch
                %368 = sbr.rel (0) target = $region66
              $region65: #{tpu_custom_call.1} parent=43 // pred_region
                %s369 = sdiv.u32.pop %s297, 7
                %s370 = srem.u32.pop %s297, 7
                // While loop
                $region67: #{tpu_custom_call.1} parent=65 // loop_pre_header
                  _
                $region68: #{tpu_custom_call.1} parent=65 // loop_header
                  %s372 = sphi 0, %s374
                  %p373 = scmp.ge.s32.totalorder %s372, %s369
                  %s377 = sphi 0, %s396
                  %s378 = sphi %s290, %s399
                  %s379 = sphi %s301, %s400
                $region69: #{tpu_custom_call.1} parent=65 // loop_header_branch
                  %376 = sbr.rel (%p373) target = $region73
                $region70: #{tpu_custom_call.1} parent=65 // loop_body
                  %v380 = vld [vmem:[%s378] sm:$0xff]
                  %381 = vst [vmem:[%s379] sm:$0xff] %v380
                  %v382 = vld [vmem:[%s378 + $0x8] sm:$0xff]
                  %383 = vst [vmem:[%s379 + $0x8] sm:$0xff] %v382
                  %v384 = vld [vmem:[%s378 + $0x10] sm:$0xff]
                  %385 = vst [vmem:[%s379 + $0x10] sm:$0xff] %v384
                  %v386 = vld [vmem:[%s378 + $0x18] sm:$0xff]
                  %387 = vst [vmem:[%s379 + $0x18] sm:$0xff] %v386
                  %v388 = vld [vmem:[%s378 + $0x20] sm:$0xff]
                  %389 = vst [vmem:[%s379 + $0x20] sm:$0xff] %v388
                  %v390 = vld [vmem:[%s378 + $0x28] sm:$0xff]
                  %391 = vst [vmem:[%s379 + $0x28] sm:$0xff] %v390
                  %v392 = vld [vmem:[%s378 + $0x30] sm:$0xff]
                  %393 = vst [vmem:[%s379 + $0x30] sm:$0xff] %v392
                  %s394 = sadd.s32 1, %s377
                  %p395 = scmp.ge.s32.totalorder %s394, %s369
                  %s396 = scalar_select %p395, 0, %s394
                  %s397 = smul.u32 %s396, 56
                  %s398 = smul.u32 %s396, 56
                  %s399 = scalar_lea.vmem %s290, %s397 [#allocation3]
                  %s400 = scalar_lea.vmem %s301, %s398
                $region71: #{tpu_custom_call.1} parent=65 // loop_footer
                  %s374 = sadd.s32 %s372, 1
                $region72: #{tpu_custom_call.1} parent=65 // loop_footer_branch
                  %371 = sbr.rel target = $region68
                $region73: #{tpu_custom_call.1} parent=65 // loop_exit
                  _
                %s401 = sdiv.u32.pop %s297, 7
                %s402 = srem.u32.pop %s297, 7
                %s403 = smul.u32 %s401, 7
                %s404 = smul.u32 8, %s403
                %s405 = scalar_lea.vmem %s290, %s404 [#allocation3]
                %s406 = smul.u32 8, %s403
                %s407 = scalar_lea.vmem %s301, %s406
                // While loop
                $region74: #{tpu_custom_call.1} parent=65 // loop_pre_header
                  _
                $region75: #{tpu_custom_call.1} parent=65 // loop_header
                  %s409 = sphi 0, %s411
                  %p410 = scmp.ge.s32.totalorder %s409, %s402
                  %s414 = sphi 0, %s421
                  %s415 = sphi %s405, %s424
                  %s416 = sphi %s407, %s425
                $region76: #{tpu_custom_call.1} parent=65 // loop_header_branch
                  %413 = sbr.rel (%p410) target = $region80
                $region77: #{tpu_custom_call.1} parent=65 // loop_body
                  %v417 = vld [vmem:[%s415] sm:$0xff]
                  %418 = vst [vmem:[%s416] sm:$0xff] %v417
                  %s419 = sadd.s32 1, %s414
                  %p420 = scmp.ge.s32.totalorder %s419, %s402
                  %s421 = scalar_select %p420, 0, %s419
                  %s422 = smul.u32 %s421, 8
                  %s423 = smul.u32 %s421, 8
                  %s424 = scalar_lea.vmem %s405, %s422 [#allocation3]
                  %s425 = scalar_lea.vmem %s407, %s423
                $region78: #{tpu_custom_call.1} parent=65 // loop_footer
                  %s411 = sadd.s32 %s409, 1
                $region79: #{tpu_custom_call.1} parent=65 // loop_footer_branch
                  %408 = sbr.rel target = $region75
                $region80: #{tpu_custom_call.1} parent=65 // loop_exit
                  _
              $region66: #{tpu_custom_call.1} parent=43 // pred_fallthru
                _
              // Predicated region
              $region81: #{tpu_custom_call.1} parent=43 // pred_check
                _
              $region82: #{tpu_custom_call.1} parent=43 // pred_check_branch
                %427 = sbr.rel target = $region84
              $region83: #{tpu_custom_call.1} parent=43 // pred_region
                _
              $region84: #{tpu_custom_call.1} parent=43 // pred_fallthru
                _
            $region44: #{tpu_custom_call.1} parent=39 // pred_fallthru
              _
            // Predicated region
            $region45: #{tpu_custom_call.1} parent=39 // pred_check
              _
            $region46: #{tpu_custom_call.1} parent=39 // pred_check_branch
              %308 = sbr.rel target = $region48
            $region47: #{tpu_custom_call.1} parent=39 // pred_region
              %s310 = sdiv.u32.pop %s297, 7
              %s311 = srem.u32.pop %s297, 7
              // While loop
              $region49: #{tpu_custom_call.1} parent=47 // loop_pre_header
                _
              $region50: #{tpu_custom_call.1} parent=47 // loop_header
                %s313 = sphi 0, %s315
                %p314 = scmp.ge.s32.totalorder %s313, %s310
                %s318 = sphi 0, %s337
                %s319 = sphi %s290, %s340
                %s320 = sphi %s301, %s341
              $region51: #{tpu_custom_call.1} parent=47 // loop_header_branch
                %317 = sbr.rel (%p314) target = $region55
              $region52: #{tpu_custom_call.1} parent=47 // loop_body
                %v321 = vld [vmem:[%s319] sm:$0xff]
                %322 = vst [vmem:[%s320] sm:$0xff] %v321
                %v323 = vld [vmem:[%s319 + $0x8] sm:$0xff]
                %324 = vst [vmem:[%s320 + $0x8] sm:$0xff] %v323
                %v325 = vld [vmem:[%s319 + $0x10] sm:$0xff]
                %326 = vst [vmem:[%s320 + $0x10] sm:$0xff] %v325
                %v327 = vld [vmem:[%s319 + $0x18] sm:$0xff]
                %328 = vst [vmem:[%s320 + $0x18] sm:$0xff] %v327
                %v329 = vld [vmem:[%s319 + $0x20] sm:$0xff]
                %330 = vst [vmem:[%s320 + $0x20] sm:$0xff] %v329
                %v331 = vld [vmem:[%s319 + $0x28] sm:$0xff]
                %332 = vst [vmem:[%s320 + $0x28] sm:$0xff] %v331
                %v333 = vld [vmem:[%s319 + $0x30] sm:$0xff]
                %334 = vst [vmem:[%s320 + $0x30] sm:$0xff] %v333
                %s335 = sadd.s32 1, %s318
                %p336 = scmp.ge.s32.totalorder %s335, %s310
                %s337 = scalar_select %p336, 0, %s335
                %s338 = smul.u32 %s337, 56
                %s339 = smul.u32 %s337, 56
                %s340 = scalar_lea.vmem %s290, %s338 [#allocation3]
                %s341 = scalar_lea.vmem %s301, %s339
              $region53: #{tpu_custom_call.1} parent=47 // loop_footer
                %s315 = sadd.s32 %s313, 1
              $region54: #{tpu_custom_call.1} parent=47 // loop_footer_branch
                %312 = sbr.rel target = $region50
              $region55: #{tpu_custom_call.1} parent=47 // loop_exit
                _
              %s342 = sdiv.u32.pop %s297, 7
              %s343 = srem.u32.pop %s297, 7
              %s344 = smul.u32 %s342, 7
              %s345 = smul.u32 8, %s344
              %s346 = scalar_lea.vmem %s290, %s345 [#allocation3]
              %s347 = smul.u32 8, %s344
              %s348 = scalar_lea.vmem %s301, %s347
              // While loop
              $region56: #{tpu_custom_call.1} parent=47 // loop_pre_header
                _
              $region57: #{tpu_custom_call.1} parent=47 // loop_header
                %s350 = sphi 0, %s352
                %p351 = scmp.ge.s32.totalorder %s350, %s343
                %s355 = sphi 0, %s362
                %s356 = sphi %s346, %s365
                %s357 = sphi %s348, %s366
              $region58: #{tpu_custom_call.1} parent=47 // loop_header_branch
                %354 = sbr.rel (%p351) target = $region62
              $region59: #{tpu_custom_call.1} parent=47 // loop_body
                %v358 = vld [vmem:[%s356] sm:$0xff]
                %359 = vst [vmem:[%s357] sm:$0xff] %v358
                %s360 = sadd.s32 1, %s355
                %p361 = scmp.ge.s32.totalorder %s360, %s343
                %s362 = scalar_select %p361, 0, %s360
                %s363 = smul.u32 %s362, 8
                %s364 = smul.u32 %s362, 8
                %s365 = scalar_lea.vmem %s346, %s363 [#allocation3]
                %s366 = scalar_lea.vmem %s348, %s364
              $region60: #{tpu_custom_call.1} parent=47 // loop_footer
                %s352 = sadd.s32 %s350, 1
              $region61: #{tpu_custom_call.1} parent=47 // loop_footer_branch
                %349 = sbr.rel target = $region57
              $region62: #{tpu_custom_call.1} parent=47 // loop_exit
                _
            $region48: #{tpu_custom_call.1} parent=39 // pred_fallthru
              _
          $region40: #{tpu_custom_call.1} parent=35 // pred_fallthru
            _
          %428 = vnop
        $region36: #{tpu_custom_call.1} parent=31 // pred_fallthru
          _
      $region32: #{tpu_custom_call.1} parent=5 // pred_fallthru
        _
      %p429 = scmp.le.s32.totalorder 2, %s10
      // Predicated region
      $region85: #{tpu_custom_call.1} parent=5 // pred_check
        %p430 = pneg %p429
      $region86: #{tpu_custom_call.1} parent=5 // pred_check_branch
        %432 = sbr.rel (%p430) target = $region88
      $region87: #{tpu_custom_call.1} parent=5 // pred_region
        %s433 = ssub.s32 %s10, 2
        // Predicated region
        $region89: #{tpu_custom_call.1} parent=87 // pred_check
          %p434 = pneg %p107
        $region90: #{tpu_custom_call.1} parent=87 // pred_check_branch
          %436 = sbr.rel (%p434) target = $region92
        $region91: #{tpu_custom_call.1} parent=87 // pred_region
          %s437 = sand.u32 %s92, 1
          %s438 = sand.u32 %s92, 1
          %s439 = smul.addr %s438, 56
          %s440 = scalar_lea.vmem [#allocation3], %s439
        $region92: #{tpu_custom_call.1} parent=87 // pred_fallthru
          _
      $region88: #{tpu_custom_call.1} parent=5 // pred_fallthru
        _
    $region6: #{tpu_custom_call.1} parent=1 // loop_footer
      %s14 = sadd.s32 1, %s10
    $region7: #{tpu_custom_call.1} parent=1 // loop_footer_branch
      %9 = sbr.rel target = $region3
    $region8: #{tpu_custom_call.1} parent=1 // loop_exit
      _

</llo_original>
